<compile_context>
chip_gen: v7x
topology: tpu7x:2x2x1
jax: 0.10.0
libtpu: 0.0.40
codegen_flags: <defaults>
</compile_context>

<pallas_src>
import jax
import jax.numpy as jnp
from jax.experimental import pallas as pl
from jax.experimental.pallas import tpu as pltpu


def _round_up(n: int, m: int) -> int:
    return ((n + m - 1) // m) * m


def _multi_output_kernel(
    x_ref,      # [tb, I]   bf16
    w1_ref,     # [I,  H]   bf16
    b1_ref,     # [1,  H]   f32
    wh_ref,     # [H,  3O]  bf16 (three heads concatenated along the output dim)
    bh_ref,     # [1,  3O]  f32
    oO_ref,     # [tb, O]   f32
    oOm_ref,    # [tb, O]   f32
    oTh_ref,    # [tb, O]   f32
):
    # shared = ReLU(x @ W1 + b1), accumulation and epilogue in f32
    h = jnp.dot(x_ref[...], w1_ref[...], preferred_element_type=jnp.float32)
    h = jnp.maximum(h + b1_ref[...], 0.0)

    # all three heads in one MXU push: [tb, H] @ [H, 3O]
    h = h.astype(wh_ref.dtype)  # back to bf16 so the MXU runs at native rate
    out = jnp.dot(h, wh_ref[...], preferred_element_type=jnp.float32) + bh_ref[...]

    O = oO_ref.shape[-1]
    oO_ref[...] = out[:, :O].astype(oO_ref.dtype)
    oOm_ref[...] = out[:, O:2 * O].astype(oOm_ref.dtype)
    oTh_ref[...] = out[:, 2 * O:3 * O].astype(oTh_ref.dtype)


def prepare_params(params):
    """One-time weight prep, hoisted out of the per-call hot path.

    Fuses the three head weights/biases into a single [H, 3*O] / [1, 3*O]
    pair and casts the weight matrices to bf16 (biases stay f32 for the f32
    epilogue inside the kernel).
    """
    wh = jnp.concatenate([params["wO"], params["wOm"], params["wTh"]], axis=1)
    bh = jnp.concatenate([params["bO"], params["bOm"], params["bTh"]], axis=1)
    return {
        "w1": params["w1"].astype(jnp.bfloat16),
        "b1": params["b1"].astype(jnp.float32),
        "wh": wh.astype(jnp.bfloat16),
        "bh": bh.astype(jnp.float32),
    }


@jax.jit
def multi_output_forward(x, prepared):
    """x: [B, input_size] float32. prepared: output of prepare_params.

    Returns (out_O, out_omega, out_theta), each [B, output_size] float32.
    """
    w1, b1, wh, bh = prepared["w1"], prepared["b1"], prepared["wh"], prepared["bh"]
    B, I = x.shape
    H = w1.shape[1]
    O3 = wh.shape[1]
    O = O3 // 3

    # Batch tiling: the only x-dependent prep left in the hot path.
    Bp = _round_up(B, 8)
    if Bp <= 512:
        tb = Bp                 # single tile for small batches
    else:
        tb = 512                # multiple of 128; >= 2 tiles -> both TCs on v7x
        Bp = _round_up(Bp, tb)

    xq = x.astype(jnp.bfloat16)           # halve HBM read bytes of the dominant stream
    if Bp != B:                            # resolved at trace time (static shapes)
        xq = jnp.pad(xq, ((0, Bp - B), (0, 0)))

    grid = (Bp // tb,)

    flops = 2 * Bp * (I * H + H * O3)
    bytes_accessed = (
        xq.size * 2                     # x (bf16)
        + w1.size * 2 + wh.size * 2     # weights (bf16)
        + b1.size * 4 + bh.size * 4     # biases (f32)
        + 3 * Bp * O * 4                # outputs (f32)
    )

    outs = pl.pallas_call(
        _multi_output_kernel,
        out_shape=(
            jax.ShapeDtypeStruct((Bp, O), jnp.float32),
            jax.ShapeDtypeStruct((Bp, O), jnp.float32),
            jax.ShapeDtypeStruct((Bp, O), jnp.float32),
        ),
        grid=grid,
        in_specs=[
            pl.BlockSpec((tb, I), lambda i: (i, 0)),   # x: tiled over batch, full I
            pl.BlockSpec((I, H), lambda i: (0, 0)),    # weights stay VMEM-resident
            pl.BlockSpec((1, H), lambda i: (0, 0)),
            pl.BlockSpec((H, O3), lambda i: (0, 0)),
            pl.BlockSpec((1, O3), lambda i: (0, 0)),
        ],
        out_specs=(
            pl.BlockSpec((tb, O), lambda i: (i, 0)),
            pl.BlockSpec((tb, O), lambda i: (i, 0)),
            pl.BlockSpec((tb, O), lambda i: (i, 0)),
        ),
        compiler_params=pltpu.CompilerParams(
            dimension_semantics=("parallel",),
            vmem_limit_bytes=32 * 1024 * 1024,
        ),
        cost_estimate=pl.CostEstimate(
            flops=flops, transcendentals=0, bytes_accessed=bytes_accessed),
    )(xq, w1, b1, wh, bh)

    if Bp != B:
        outs = tuple(o[:B] for o in outs)
    return outs


def init_params(key, input_size, hidden_size, output_size):
    """Deterministic init. Weights stored as [in, out] (transposed vs PyTorch)."""
    ks = jax.random.split(key, 8)
    s1 = 1.0 / jnp.sqrt(input_size)
    s2 = 1.0 / jnp.sqrt(hidden_size)
    u = lambda k, shape, s: jax.random.uniform(k, shape, jnp.float32, -s, s)
    return {
        "w1":  u(ks[0], (input_size, hidden_size), s1),
        "b1":  u(ks[1], (1, hidden_size), s1),
        "wO":  u(ks[2], (hidden_size, output_size), s2),
        "bO":  u(ks[3], (1, output_size), s2),
        "wOm": u(ks[4], (hidden_size, output_size), s2),
        "bOm": u(ks[5], (1, output_size), s2),
        "wTh": u(ks[6], (hidden_size, output_size), s2),
        "bTh": u(ks[7], (1, output_size), s2),
    }


if __name__ == "__main__":
    batch, input_size, hidden_size, output_size = 8, 16, 32, 8

    key = jax.random.PRNGKey(0)
    kx, kp = jax.random.split(key)
    x = jax.random.normal(kx, (batch, input_size), jnp.float32)
    params = init_params(kp, input_size, hidden_size, output_size)

    prepared = prepare_params(params)            # one-time weight prep (cached)
    outO, outOm, outTh = multi_output_forward(x, prepared)
    jax.block_until_ready((outO, outOm, outTh))

    # Pure-JAX f32 reference of the original module's math (loose tol: bf16 inputs).
    h_ref = jnp.maximum(x @ params["w1"] + params["b1"], 0.0)
    refO = h_ref @ params["wO"] + params["bO"]
    refOm = h_ref @ params["wOm"] + params["bOm"]
    refTh = h_ref @ params["wTh"] + params["bTh"]
    assert outO.shape == (batch, output_size)
    assert jnp.allclose(outO, refO, atol=1e-1, rtol=1e-1)
    assert jnp.allclose(outOm, refOm, atol=1e-1, rtol=1e-1)
    assert jnp.allclose(outTh, refTh, atol=1e-1, rtol=1e-1)

    # Tighter check against a reference that uses the same bf16-rounded inputs.
    xr = x.astype(jnp.bfloat16).astype(jnp.float32)
    w1r = prepared["w1"].astype(jnp.float32)
    whr = prepared["wh"].astype(jnp.float32)
    hr = jnp.maximum(xr @ w1r + prepared["b1"], 0.0)
    hr = hr.astype(jnp.bfloat16).astype(jnp.float32)
    ref_fused = hr @ whr + prepared["bh"]
    fused = jnp.concatenate([outO, outOm, outTh], axis=1)
    assert jnp.allclose(fused, ref_fused, atol=2e-2, rtol=2e-2)

    print("KERNEL_OK")
</pallas_src>

<mosaic_0001>
module attributes {stable_mosaic.version = 11 : i64} {
  func.func @_multi_output_kernel(%arg0: i32, %arg1: memref<8x16xbf16, #tpu.memory_space<vmem>>, %arg2: memref<16x32xbf16, #tpu.memory_space<vmem>>, %arg3: memref<1x32xf32, #tpu.memory_space<vmem>>, %arg4: memref<32x24xbf16, #tpu.memory_space<vmem>>, %arg5: memref<1x24xf32, #tpu.memory_space<vmem>>, %arg6: memref<8x8xf32, #tpu.memory_space<vmem>>, %arg7: memref<8x8xf32, #tpu.memory_space<vmem>>, %arg8: memref<8x8xf32, #tpu.memory_space<vmem>>) attributes {dimension_semantics = [#tpu.dimension_semantics<parallel>], iteration_bounds = array<i64: 1>, scalar_prefetch = 0 : i64, scratch_operands = 0 : i64, tpu.core_type = #tpu.core_type<tc>, window_params = [{transform_indices = @transform_0, window_bounds = array<i64: 8, 16>}, {pipeline_mode = #tpu.pipeline_mode<synchronous>, transform_indices = @transform_1, window_bounds = array<i64: 16, 32>}, {pipeline_mode = #tpu.pipeline_mode<synchronous>, transform_indices = @transform_2, window_bounds = array<i64: 1, 32>}, {pipeline_mode = #tpu.pipeline_mode<synchronous>, transform_indices = @transform_3, window_bounds = array<i64: 32, 24>}, {pipeline_mode = #tpu.pipeline_mode<synchronous>, transform_indices = @transform_4, window_bounds = array<i64: 1, 24>}, {transform_indices = @transform_5, window_bounds = array<i64: 8, 8>}, {transform_indices = @transform_6, window_bounds = array<i64: 8, 8>}, {transform_indices = @transform_7, window_bounds = array<i64: 8, 8>}]} {
    %c0 = arith.constant 0 : index
    %c0_0 = arith.constant 0 : index
    %0 = vector.load %arg1[%c0, %c0_0] : memref<8x16xbf16, #tpu.memory_space<vmem>>, vector<8x16xbf16>
    %c0_1 = arith.constant 0 : index
    %c0_2 = arith.constant 0 : index
    %1 = vector.load %arg2[%c0_1, %c0_2] : memref<16x32xbf16, #tpu.memory_space<vmem>>, vector<16x32xbf16>
    %cst = arith.constant dense<0.000000e+00> : vector<8x32xf32>
    %2 = tpu.matmul %0, %1, %cst {dimension_numbers = #tpu.dot_dimension_numbers<[1], [0], [0], [1], [0, 0, 1, 1], [], []>} : vector<8x16xbf16>, vector<16x32xbf16>, vector<8x32xf32> -> vector<8x32xf32>
    %c0_3 = arith.constant 0 : index
    %c0_4 = arith.constant 0 : index
    %3 = vector.load %arg3[%c0_3, %c0_4] : memref<1x32xf32, #tpu.memory_space<vmem>>, vector<1x32xf32>
    %4 = vector.broadcast %3 : vector<1x32xf32> to vector<8x32xf32>
    %5 = arith.addf %2, %4 : vector<8x32xf32>
    %cst_5 = arith.constant 0.000000e+00 : f32
    %6 = vector.broadcast %cst_5 : f32 to vector<8x32xf32>
    %7 = arith.maximumf %5, %6 : vector<8x32xf32>
    %8 = arith.truncf %7 : vector<8x32xf32> to vector<8x32xbf16>
    %c0_6 = arith.constant 0 : index
    %c0_7 = arith.constant 0 : index
    %9 = vector.load %arg4[%c0_6, %c0_7] : memref<32x24xbf16, #tpu.memory_space<vmem>>, vector<32x24xbf16>
    %cst_8 = arith.constant dense<0.000000e+00> : vector<8x24xf32>
    %10 = tpu.matmul %8, %9, %cst_8 {dimension_numbers = #tpu.dot_dimension_numbers<[1], [0], [0], [1], [0, 0, 1, 1], [], []>} : vector<8x32xbf16>, vector<32x24xbf16>, vector<8x24xf32> -> vector<8x24xf32>
    %c0_9 = arith.constant 0 : index
    %c0_10 = arith.constant 0 : index
    %11 = vector.load %arg5[%c0_9, %c0_10] : memref<1x24xf32, #tpu.memory_space<vmem>>, vector<1x24xf32>
    %12 = vector.broadcast %11 : vector<1x24xf32> to vector<8x24xf32>
    %13 = arith.addf %10, %12 : vector<8x24xf32>
    %14 = vector.extract_strided_slice %13 {offsets = [0, 0], sizes = [8, 8], strides = [1, 1]} : vector<8x24xf32> to vector<8x8xf32>
    %c0_11 = arith.constant 0 : index
    %c0_12 = arith.constant 0 : index
    %15 = vector.load %arg6[%c0_11, %c0_12] : memref<8x8xf32, #tpu.memory_space<vmem>>, vector<8x8xf32>
    tpu.vector_store %arg6[%c0_11, %c0_12], %14 {strides = array<i32>} : memref<8x8xf32, #tpu.memory_space<vmem>>, vector<8x8xf32>,
    %16 = vector.extract_strided_slice %13 {offsets = [0, 8], sizes = [8, 8], strides = [1, 1]} : vector<8x24xf32> to vector<8x8xf32>
    %c0_13 = arith.constant 0 : index
    %c0_14 = arith.constant 0 : index
    %17 = vector.load %arg7[%c0_13, %c0_14] : memref<8x8xf32, #tpu.memory_space<vmem>>, vector<8x8xf32>
    tpu.vector_store %arg7[%c0_13, %c0_14], %16 {strides = array<i32>} : memref<8x8xf32, #tpu.memory_space<vmem>>, vector<8x8xf32>,
    %18 = vector.extract_strided_slice %13 {offsets = [0, 16], sizes = [8, 8], strides = [1, 1]} : vector<8x24xf32> to vector<8x8xf32>
    %c0_15 = arith.constant 0 : index
    %c0_16 = arith.constant 0 : index
    %19 = vector.load %arg8[%c0_15, %c0_16] : memref<8x8xf32, #tpu.memory_space<vmem>>, vector<8x8xf32>
    tpu.vector_store %arg8[%c0_15, %c0_16], %18 {strides = array<i32>} : memref<8x8xf32, #tpu.memory_space<vmem>>, vector<8x8xf32>,
    return
  }
  func.func @transform_0(%arg0: i32) -> (i32, i32) {
    %c0_i32 = arith.constant 0 : i32
    %c0_i32_0 = arith.constant 0 : i32
    return %arg0, %c0_i32 : i32, i32
  }
  func.func @transform_1(%arg0: i32) -> (i32, i32) {
    %c0_i32 = arith.constant 0 : i32
    %c0_i32_0 = arith.constant 0 : i32
    %c0_i32_1 = arith.constant 0 : i32
    return %c0_i32, %c0_i32_0 : i32, i32
  }
  func.func @transform_2(%arg0: i32) -> (i32, i32) {
    %c0_i32 = arith.constant 0 : i32
    %c0_i32_0 = arith.constant 0 : i32
    %c0_i32_1 = arith.constant 0 : i32
    return %c0_i32, %c0_i32_0 : i32, i32
  }
  func.func @transform_3(%arg0: i32) -> (i32, i32) {
    %c0_i32 = arith.constant 0 : i32
    %c0_i32_0 = arith.constant 0 : i32
    %c0_i32_1 = arith.constant 0 : i32
    return %c0_i32, %c0_i32_0 : i32, i32
  }
  func.func @transform_4(%arg0: i32) -> (i32, i32) {
    %c0_i32 = arith.constant 0 : i32
    %c0_i32_0 = arith.constant 0 : i32
    %c0_i32_1 = arith.constant 0 : i32
    return %c0_i32, %c0_i32_0 : i32, i32
  }
  func.func @transform_5(%arg0: i32) -> (i32, i32) {
    %c0_i32 = arith.constant 0 : i32
    %c0_i32_0 = arith.constant 0 : i32
    return %arg0, %c0_i32 : i32, i32
  }
  func.func @transform_6(%arg0: i32) -> (i32, i32) {
    %c0_i32 = arith.constant 0 : i32
    %c0_i32_0 = arith.constant 0 : i32
    return %arg0, %c0_i32 : i32, i32
  }
  func.func @transform_7(%arg0: i32) -> (i32, i32) {
    %c0_i32 = arith.constant 0 : i32
    %c0_i32_0 = arith.constant 0 : i32
    return %arg0, %c0_i32 : i32, i32
  }
}

</mosaic_0001>

<llo_original>
// kernel: multi_output_forward.1
$region0: #{multi_output_forward.1}
  #allocation0 [shape = 'u32[]', space=smem, size = 0x4, offset = 0x4, fixed_abs, tag = 'smem constant byte address 0x4 - core index']
  #allocation1 [shape = 'u32[144,128]{1,0:T(1,128)}', space=vmem, size = 0x12000, scoped, tag = 'internal scratch']
  %s0 = inlined_call_operand.vmem [shape: bf16[8,16], index: 0, kind: input, shape index: {}]
  %s1 = inlined_call_operand.vmem [shape: bf16[16,32], index: 1, kind: input, shape index: {}]
  %s2 = inlined_call_operand.vmem [shape: f32[1,32], index: 2, kind: input, shape index: {}]
  %s3 = inlined_call_operand.vmem [shape: bf16[32,24], index: 3, kind: input, shape index: {}]
  %s4 = inlined_call_operand.vmem [shape: f32[1,24], index: 4, kind: input, shape index: {}]
  %s5 = inlined_call_operand.hbm [shape: f32[8,8], index: 5, kind: output, shape index: {0}]
  %s6 = inlined_call_operand.hbm [shape: f32[8,8], index: 6, kind: output, shape index: {1}]
  %s7 = inlined_call_operand.hbm [shape: f32[8,8], index: 7, kind: output, shape index: {2}]
  %8 = xla_tuple %s5, %s6, %s7
  %s9 = sld [smem:[#allocation0]]
  $region46: #{multi_output_forward.1} parent=0
    _
  %s11 = ssub.s32 1, %s9
  %s12 = scalar_select 0, %s11, %s9
  $region1: #{multi_output_forward.1} parent=0
    #allocation2 [shape = 'u8[4096]{0}', space=vmem, size = 0x1000, scoped, tag = 'output window, operand 0, single buffered']
    #allocation3 [shape = 's32[1]{0}', space=sflag, size = 0x4, scoped, tag = 'scoped memory for multi_output_forward.1']
    #allocation4 [shape = 'u8[4096]{0}', space=vmem, size = 0x1000, scoped, tag = 'output window, operand 1, single buffered']
    #allocation5 [shape = 's32[1]{0}', space=sflag, size = 0x4, scoped, tag = 'scoped memory for multi_output_forward.1']
    #allocation6 [shape = 'u8[4096]{0}', space=vmem, size = 0x1000, scoped, tag = 'output window, operand 2, single buffered']
    %13 = vsyncpa [#allocation3], 0
    %14 = vsyncpa [#allocation5], 0
    // Predicated region
    $region2: #{multi_output_forward.1} parent=1 // pred_check
      _
    $region3: #{multi_output_forward.1} parent=1 // pred_check_branch
      %16 = sbr.rel (0) target = $region5
    $region4: #{multi_output_forward.1} parent=1 // pred_region
      _
    $region5: #{multi_output_forward.1} parent=1 // pred_fallthru
      _
    // Predicated region
    $region6: #{multi_output_forward.1} parent=1 // pred_check
      _
    $region7: #{multi_output_forward.1} parent=1 // pred_check_branch
      %18 = sbr.rel (0) target = $region9
    $region8: #{multi_output_forward.1} parent=1 // pred_region
      _
    $region9: #{multi_output_forward.1} parent=1 // pred_fallthru
      _
    // Predicated region
    $region10: #{multi_output_forward.1} parent=1 // pred_check
      _
    $region11: #{multi_output_forward.1} parent=1 // pred_check_branch
      %20 = sbr.rel (0) target = $region13
    $region12: #{multi_output_forward.1} parent=1 // pred_region
      _
    $region13: #{multi_output_forward.1} parent=1 // pred_fallthru
      _
    // Predicated region
    $region14: #{multi_output_forward.1} parent=1 // pred_check
      _
    $region15: #{multi_output_forward.1} parent=1 // pred_check_branch
      %22 = sbr.rel (0) target = $region17
    $region16: #{multi_output_forward.1} parent=1 // pred_region
      _
    $region17: #{multi_output_forward.1} parent=1 // pred_fallthru
      _
    // Predicated region
    $region18: #{multi_output_forward.1} parent=1 // pred_check
      _
    $region19: #{multi_output_forward.1} parent=1 // pred_check_branch
      %24 = sbr.rel (0) target = $region21
    $region20: #{multi_output_forward.1} parent=1 // pred_region
      _
    $region21: #{multi_output_forward.1} parent=1 // pred_fallthru
      _
    %v26 = vld [vmem:[%s0] sm:$0xf]
    %v27 = vld [vmem:[%s1] sm:$0xf]
    %v28 = vld [vmem:[%s1 + $0x4] sm:$0xf]
    %v29 = vld [vmem:[%s2] sm:$0x1]
    %v31 = vlaneseq
    %v32 = vshrl.u32 %v31, 7
    %v33 = vsub.s32 0, %v32
    %v34 = vrot.slane %v29, %v33
    %v38 = vunpack.c.l.b16 %v27
    %v39 = vunpack.c.l.b16 %v28
    %v40 = vpack.c.b16 %v39, %v38
    %vm42 = vcmask 130048
    %v44 = vsel %vm42, %v26, 0
    %46 = vmatprep.subr.bf16.mxu0 0
    %47 = vmatpush1.bf16.msra.mxu0 %v40
    %48 = vmatprep.subr.bf16.mxu0 0
    %49 = vmatpush1.bf16.msra.mxu0 0
    %50 = vmatprep.subr.bf16.mxu0 0
    %51 = vmatpush1.bf16.msra.mxu0 0
    %52 = vmatprep.subr.bf16.mxu0 0
    %53 = vmatpush1.bf16.msra.mxu0 0
    %54 = vmatprep.subr.bf16.mxu0 0
    %55 = vmatpush1.bf16.msra.mxu0 0
    %56 = vmatprep.subr.bf16.mxu0 0
    %57 = vmatpush1.bf16.msra.mxu0 0
    %58 = vmatprep.subr.bf16.mxu0 0
    %59 = vmatpush1.bf16.msra.mxu0 0
    %60 = vmatprep.subr.bf16.mxu0 0
    %61 = vmatpush1.bf16.msra.mxu0 0
    %62 = vmatprep.subr.bf16.mxu0 0
    %63 = vmatpush1.bf16.msra.mxu0 0
    %64 = vmatprep.subr.bf16.mxu0 0
    %65 = vmatpush1.bf16.msra.mxu0 0
    %66 = vmatprep.subr.bf16.mxu0 0
    %67 = vmatpush1.bf16.msra.mxu0 0
    %68 = vmatprep.subr.bf16.mxu0 0
    %69 = vmatpush1.bf16.msra.mxu0 0
    %70 = vmatprep.subr.bf16.mxu0 0
    %71 = vmatpush1.bf16.msra.mxu0 0
    %72 = vmatprep.subr.bf16.mxu0 0
    %73 = vmatpush1.bf16.msra.mxu0 0
    %74 = vmatprep.subr.bf16.mxu0 0
    %75 = vmatpush1.bf16.msra.mxu0 0
    %76 = vmatprep.subr.bf16.mxu0 0
    %77 = vmatpush1.bf16.msra.mxu0 0
    %78 = vmatprep.mubr.bf16.mxu0 0
    %79 = vmatmul.mubr.bf16.gmra.mrb[0].mxu0 %v44
    %v80 = vpop.f32.mrb[0].mxu0
    %v81 = vadd.f32 %v34, %v80
    %v82 = vpop.f32.mrb[0].mxu0
    %v83 = vpop.f32.mrb[0].mxu0
    %v84 = vpop.f32.mrb[0].mxu0
    %85 = vdwg.mxu0
    %v86 = vmax.f32 %v81, 0.0
    %v87 = vpack.c.bf16 %v86, %v86
    %v88 = vld [vmem:[%s3] sm:$0xf]
    %v89 = vld [vmem:[%s3 + $0x4] sm:$0xf]
    %v90 = vld [vmem:[%s3 + $0x8] sm:$0xf]
    %v91 = vld [vmem:[%s3 + $0xc] sm:$0xf]
    %v92 = vld [vmem:[%s4] sm:$0x1]
    %v94 = vlaneseq
    %v95 = vshrl.u32 %v94, 7
    %v96 = vsub.s32 0, %v95
    %v97 = vrot.slane %v92, %v96
    %v103 = vunpack.c.l.b16 %v88
    %v104 = vunpack.c.l.b16 %v89
    %v105 = vunpack.c.l.b16 %v90
    %v106 = vunpack.c.l.b16 %v91
    %v107 = vpack.c.b16 %v104, %v103
    %v108 = vpack.c.b16 %v106, %v105
    %vm111 = vcmask 261120
    %v113 = vsel %vm111, %v87, 0
    %115 = vmatprep.subr.bf16.mxu0 0
    %116 = vmatpush1.bf16.msra.mxu0 %v107
    %117 = vmatprep.subr.bf16.mxu0 0
    %118 = vmatpush1.bf16.msra.mxu0 %v108
    %119 = vmatprep.subr.bf16.mxu0 0
    %120 = vmatpush1.bf16.msra.mxu0 0
    %121 = vmatprep.subr.bf16.mxu0 0
    %122 = vmatpush1.bf16.msra.mxu0 0
    %123 = vmatprep.subr.bf16.mxu0 0
    %124 = vmatpush1.bf16.msra.mxu0 0
    %125 = vmatprep.subr.bf16.mxu0 0
    %126 = vmatpush1.bf16.msra.mxu0 0
    %127 = vmatprep.subr.bf16.mxu0 0
    %128 = vmatpush1.bf16.msra.mxu0 0
    %129 = vmatprep.subr.bf16.mxu0 0
    %130 = vmatpush1.bf16.msra.mxu0 0
    %131 = vmatprep.subr.bf16.mxu0 0
    %132 = vmatpush1.bf16.msra.mxu0 0
    %133 = vmatprep.subr.bf16.mxu0 0
    %134 = vmatpush1.bf16.msra.mxu0 0
    %135 = vmatprep.subr.bf16.mxu0 0
    %136 = vmatpush1.bf16.msra.mxu0 0
    %137 = vmatprep.subr.bf16.mxu0 0
    %138 = vmatpush1.bf16.msra.mxu0 0
    %139 = vmatprep.subr.bf16.mxu0 0
    %140 = vmatpush1.bf16.msra.mxu0 0
    %141 = vmatprep.subr.bf16.mxu0 0
    %142 = vmatpush1.bf16.msra.mxu0 0
    %143 = vmatprep.subr.bf16.mxu0 0
    %144 = vmatpush1.bf16.msra.mxu0 0
    %145 = vmatprep.subr.bf16.mxu0 0
    %146 = vmatpush1.bf16.msra.mxu0 0
    %147 = vmatprep.mubr.bf16.mxu0 0
    %148 = vmatmul.mubr.bf16.gmra.mrb[0].mxu0 %v113
    %v149 = vpop.f32.mrb[0].mxu0
    %v150 = vadd.f32 %v97, %v149
    %v151 = vpop.f32.mrb[0].mxu0
    %v152 = vpop.f32.mrb[0].mxu0
    %v153 = vpop.f32.mrb[0].mxu0
    %154 = vdwg.mxu0
    %vm155 = vcmask 64512
    %156 = vst.msk [vmem:[#allocation2] sm:$0xff] %vm155, %v150
    %158 = vrot.lane.b32.xlu0 %v150, 120
    %v159 = vpop.permute.xlu0 %158
    %161 = vst.msk [vmem:[#allocation4] sm:$0xff] %vm155, %v159
    %162 = vrot.lane.b32.xlu0 %v150, 112
    %v163 = vpop.permute.xlu0 %162
    %165 = vst.msk [vmem:[#allocation6] sm:$0xff] %vm155, %v163
    // Predicated region
    $region22: #{multi_output_forward.1} parent=1 // pred_check
      _
    $region23: #{multi_output_forward.1} parent=1 // pred_check_branch
      %167 = sbr.rel (0) target = $region25
    $region24: #{multi_output_forward.1} parent=1 // pred_region
      %s169 = ssub.s32 128, 128
      %170 = vsyncadd [#allocation3], %s169
      %s172 = sshll.u32 [#allocation2], 4
      %s173 = int_to_ptr.vmem [resolvable:$true] %s172
      %175 = dma.vmem_to_hbm [thread:$0]  %s173, 128, %s5, [#allocation3]
    $region25: #{multi_output_forward.1} parent=1 // pred_fallthru
      _
    // Predicated region
    $region26: #{multi_output_forward.1} parent=1 // pred_check
      _
    $region27: #{multi_output_forward.1} parent=1 // pred_check_branch
      %177 = sbr.rel (0) target = $region29
    $region28: #{multi_output_forward.1} parent=1 // pred_region
      %s179 = ssub.s32 128, 128
      %180 = vsyncadd [#allocation5], %s179
      %s182 = sshll.u32 [#allocation4], 4
      %s183 = int_to_ptr.vmem [resolvable:$true] %s182
      %185 = dma.vmem_to_hbm [thread:$0]  %s183, 128, %s6, [#allocation5]
    $region29: #{multi_output_forward.1} parent=1 // pred_fallthru
      _
    // Predicated region
    $region30: #{multi_output_forward.1} parent=1 // pred_check
      _
    $region31: #{multi_output_forward.1} parent=1 // pred_check_branch
      %187 = sbr.rel (0) target = $region33
    $region32: #{multi_output_forward.1} parent=1 // pred_region
      %s189 = ssub.s32 128, 128
      %190 = vsyncadd [#allocation5], %s189
      %s192 = sshll.u32 [#allocation6], 4
      %s193 = int_to_ptr.vmem [resolvable:$true] %s192
      %195 = dma.vmem_to_hbm [thread:$0]  %s193, 128, %s7, [#allocation5]
    $region33: #{multi_output_forward.1} parent=1 // pred_fallthru
      _
    // Predicated region
    $region34: #{multi_output_forward.1} parent=1 // pred_check
      _
    $region35: #{multi_output_forward.1} parent=1 // pred_check_branch
      %197 = sbr.rel (0) target = $region37
    $region36: #{multi_output_forward.1} parent=1 // pred_region
      %198 = dma.done [#allocation3], 128
    $region37: #{multi_output_forward.1} parent=1 // pred_fallthru
      _
    // Predicated region
    $region38: #{multi_output_forward.1} parent=1 // pred_check
      _
    $region39: #{multi_output_forward.1} parent=1 // pred_check_branch
      %200 = sbr.rel (0) target = $region41
    $region40: #{multi_output_forward.1} parent=1 // pred_region
      %201 = dma.done [#allocation5], 128
    $region41: #{multi_output_forward.1} parent=1 // pred_fallthru
      _
    // Predicated region
    $region42: #{multi_output_forward.1} parent=1 // pred_check
      _
    $region43: #{multi_output_forward.1} parent=1 // pred_check_branch
      %203 = sbr.rel (0) target = $region45
    $region44: #{multi_output_forward.1} parent=1 // pred_region
      %204 = dma.done [#allocation5], 128
    $region45: #{multi_output_forward.1} parent=1 // pred_fallthru
      _
    %205 = vsyncpa [#allocation3], 1
    %206 = vsyncpa [#allocation5], 1

</llo_original>
